<compile_context>
chip_gen: v5e
topology: v5e:2x2
jax: 0.10.0
libtpu: 0.0.40
codegen_flags: <defaults>
</compile_context>

<pallas_src>
import jax
import jax.numpy as jnp
from jax.experimental import pallas as pl
from jax.experimental.pallas import tpu as pltpu


def disentangle_kernel(x_ref, w1_ref, wb_ref, b1_ref, bb_ref,
                       eps_a_ref, eps_b_ref, a_ref, b_ref):
    H = w1_ref.shape[1]                      # static python int at trace time
    w_dtype = w1_ref.dtype                   # f32 or bf16 matmul path

    # NOTE: on a partial final batch tile the padded rows are computed (relu/exp over
    # garbage) but Pallas masks the out-of-bounds writeback, so outputs are unaffected.
    x = x_ref[...].astype(w_dtype)

    # fc1 + relu (one MXU pass); accumulate + epilogue in f32.
    h1 = jnp.dot(x, w1_ref[...], preferred_element_type=jnp.float32) + b1_ref[...]
    h1 = jnp.maximum(h1, 0.0)

    # fused branch matmul: columns are [mu_a | mu_b | lv_a | lv_b]  (one MXU pass)
    z = jnp.dot(h1.astype(w_dtype), wb_ref[...],
                preferred_element_type=jnp.float32) + bb_ref[...]

    # Static value slices; vreg-aligned whenever H % 128 == 0.
    mu_a = z[:, 0 * H:1 * H]
    mu_b = z[:, 1 * H:2 * H]
    lv_a = z[:, 2 * H:3 * H]
    lv_b = z[:, 3 * H:4 * H]

    a_ref[...] = (eps_a_ref[...] * jnp.exp(0.5 * lv_a) + mu_a).astype(a_ref.dtype)
    b_ref[...] = (eps_b_ref[...] * jnp.exp(0.5 * lv_b) + mu_b).astype(b_ref.dtype)


def pack_params(params, dtype=jnp.float32):
    """Fuse branch weights/biases once (outside the hot path).

    dtype: matmul dtype for the packed weights.  Use jnp.bfloat16 at scaled sizes for
    ~3x MXU throughput and half the weight VMEM/DMA; biases stay f32.
    """
    # column order: [mu_a | mu_b | lv_a | lv_b]
    w_branch = jnp.concatenate(
        [params["w21a"], params["w21b"], params["w22a"], params["w22b"]],
        axis=1).astype(dtype)
    b_branch = jnp.concatenate(
        [params["b21a"], params["b21b"], params["b22a"], params["b22b"]], axis=1)
    return {"w1": params["w1"].astype(dtype),
            "w_branch": w_branch,
            "b1": params["b1"].astype(jnp.float32),
            "b_branch": b_branch.astype(jnp.float32)}


def _round_up(v, m):
    return ((v + m - 1) // m) * m


def disentangle_forward(x, packed, eps_a, eps_b):
    """x: (B, E). packed: output of pack_params. eps_*: (B, E//2). Returns (a_fea, b_fea)."""
    B, E = x.shape
    H = E // 2
    w_dtype = packed["w1"].dtype

    # Cast x to the matmul dtype in the wrapper (halves x DMA bytes on the bf16 path).
    x_in = x.astype(w_dtype)

    # Batch tile: keep >= 2 grid steps once B >= 16 so v7x's two TensorCores both get
    # work; cap at 512 rows (safe under v7x's 64 MiB VMEM; sweep upward on v5e/v6e).
    if B <= 8:
        TB = B
    else:
        TB = min(512, _round_up(pl.cdiv(B, 2), 8))
    grid = (pl.cdiv(B, TB),)

    # Explicit VMEM budget: resident weights (single-buffered) + double-buffered
    # activation streams + headroom.  Clamp to [32 MiB, 64 MiB] — valid on all gens.
    w_isz = jnp.dtype(w_dtype).itemsize
    resident = (E * H + H * 4 * H) * w_isz + 5 * H * 4
    streamed = 2 * (TB * E * w_isz + 4 * TB * H * 4)      # x + eps_a/eps_b + 2 outputs
    scratch = 8 * TB * H * 4                              # h1 / z intermediates headroom
    vmem_limit = int(min(64 << 20, max(resident + streamed + scratch + (4 << 20),
                                       32 << 20)))
    # TODO(synk): if resident weights alone exceed the v7x 64 MiB budget (very large H),
    # add a grid axis over the 4H output columns of W_branch instead of keeping it resident.

    flops = 2 * B * E * H + 2 * B * H * (4 * H)
    bytes_accessed = (B * E * w_isz + (E * H + H * 4 * H) * w_isz + 5 * H * 4
                      + 4 * B * H * 4)                    # eps_a, eps_b, a_fea, b_fea
    cost = pl.CostEstimate(flops=flops,
                           transcendentals=2 * B * H,
                           bytes_accessed=bytes_accessed)

    resident_spec = lambda shape: pl.BlockSpec(shape, lambda i: (0, 0),
                                               pipeline_mode=pl.Buffered(1))

    a_fea, b_fea = pl.pallas_call(
        disentangle_kernel,
        out_shape=(jax.ShapeDtypeStruct((B, H), jnp.float32),
                   jax.ShapeDtypeStruct((B, H), jnp.float32)),
        grid_spec=pltpu.PrefetchScalarGridSpec(
            num_scalar_prefetch=0,
            grid=grid,
            in_specs=[
                pl.BlockSpec((TB, E), lambda i: (i, 0)),     # x        (batch tiled)
                resident_spec((E, H)),                        # W1       (resident, 1-buf)
                resident_spec((H, 4 * H)),                    # W_branch (resident, 1-buf)
                resident_spec((1, H)),                        # b1
                resident_spec((1, 4 * H)),                    # b_branch
                pl.BlockSpec((TB, H), lambda i: (i, 0)),      # eps_a    (batch tiled)
                pl.BlockSpec((TB, H), lambda i: (i, 0)),      # eps_b    (batch tiled)
            ],
            out_specs=[
                pl.BlockSpec((TB, H), lambda i: (i, 0)),      # a_fea
                pl.BlockSpec((TB, H), lambda i: (i, 0)),      # b_fea
            ],
        ),
        compiler_params=pltpu.CompilerParams(
            dimension_semantics=("parallel",),
            vmem_limit_bytes=vmem_limit),
        cost_estimate=cost,
    )(x_in, packed["w1"], packed["w_branch"], packed["b1"], packed["b_branch"],
      eps_a, eps_b)

    return a_fea, b_fea


def init_params(key, emb_size):
    """Deterministic xavier-uniform-like init. Weights stored transposed (in, out)."""
    H = emb_size // 2

    def linear(key, fan_in, fan_out):
        kw, _ = jax.random.split(key)
        limit = (6.0 / (fan_in + fan_out)) ** 0.5
        w = jax.random.uniform(kw, (fan_in, fan_out), jnp.float32, -limit, limit)
        b = jnp.zeros((1, fan_out), jnp.float32)
        return w, b

    keys = jax.random.split(key, 5)
    params = {}
    params["w1"], params["b1"] = linear(keys[0], emb_size, H)
    params["w21a"], params["b21a"] = linear(keys[1], H, H)
    params["w22a"], params["b22a"] = linear(keys[2], H, H)
    params["w21b"], params["b21b"] = linear(keys[3], H, H)
    params["w22b"], params["b22b"] = linear(keys[4], H, H)
    return params


def reference_forward(x, params, eps_a, eps_b):
    """Plain-JAX reference (also the preferred path for tiny B/H, per dispatch note)."""
    h1 = jnp.maximum(x @ params["w1"] + params["b1"], 0.0)
    a_mu = h1 @ params["w21a"] + params["b21a"]
    a_lv = h1 @ params["w22a"] + params["b22a"]
    b_mu = h1 @ params["w21b"] + params["b21b"]
    b_lv = h1 @ params["w22b"] + params["b22b"]
    return eps_a * jnp.exp(0.5 * a_lv) + a_mu, eps_b * jnp.exp(0.5 * b_lv) + b_mu


if __name__ == "__main__":
    emb_size = 32          # opt['feature_dim']
    batch = 8
    H = emb_size // 2

    key = jax.random.PRNGKey(0)
    k_x, k_p, k_ea, k_eb = jax.random.split(key, 4)

    x = jax.random.normal(k_x, (batch, emb_size), jnp.float32)
    params = init_params(k_p, emb_size)
    packed = pack_params(params, dtype=jnp.float32)   # f32 so the 1e-5 check holds;
                                                      # use dtype=jnp.bfloat16 at scale.
    eps_a = jax.random.normal(k_ea, (batch, H), jnp.float32)
    eps_b = jax.random.normal(k_eb, (batch, H), jnp.float32)

    a_fea, b_fea = disentangle_forward(x, packed, eps_a, eps_b)
    jax.block_until_ready((a_fea, b_fea))

    # correctness check against plain-JAX reference (unfused params)
    a_ref, b_ref = reference_forward(x, params, eps_a, eps_b)
    assert jnp.allclose(a_fea, a_ref, atol=1e-5, rtol=1e-5)
    assert jnp.allclose(b_fea, b_ref, atol=1e-5, rtol=1e-5)

    print("KERNEL_OK")
</pallas_src>

<mosaic_0001>
module attributes {stable_mosaic.version = 11 : i64} {
  func.func @disentangle_kernel(%arg0: i32, %arg1: memref<8x32xf32, #tpu.memory_space<vmem>>, %arg2: memref<32x16xf32, #tpu.memory_space<vmem>>, %arg3: memref<16x64xf32, #tpu.memory_space<vmem>>, %arg4: memref<1x16xf32, #tpu.memory_space<vmem>>, %arg5: memref<1x64xf32, #tpu.memory_space<vmem>>, %arg6: memref<8x16xf32, #tpu.memory_space<vmem>>, %arg7: memref<8x16xf32, #tpu.memory_space<vmem>>, %arg8: memref<8x16xf32, #tpu.memory_space<vmem>>, %arg9: memref<8x16xf32, #tpu.memory_space<vmem>>) attributes {dimension_semantics = [#tpu.dimension_semantics<parallel>], iteration_bounds = array<i64: 1>, scalar_prefetch = 0 : i64, scratch_operands = 0 : i64, tpu.core_type = #tpu.core_type<tc>, window_params = [{transform_indices = @transform_0, window_bounds = array<i64: 8, 32>}, {pipeline_mode = #tpu.pipeline_mode<synchronous>, transform_indices = @transform_1, window_bounds = array<i64: 32, 16>}, {pipeline_mode = #tpu.pipeline_mode<synchronous>, transform_indices = @transform_2, window_bounds = array<i64: 16, 64>}, {pipeline_mode = #tpu.pipeline_mode<synchronous>, transform_indices = @transform_3, window_bounds = array<i64: 1, 16>}, {pipeline_mode = #tpu.pipeline_mode<synchronous>, transform_indices = @transform_4, window_bounds = array<i64: 1, 64>}, {transform_indices = @transform_5, window_bounds = array<i64: 8, 16>}, {transform_indices = @transform_6, window_bounds = array<i64: 8, 16>}, {transform_indices = @transform_7, window_bounds = array<i64: 8, 16>}, {transform_indices = @transform_8, window_bounds = array<i64: 8, 16>}]} {
    %c0 = arith.constant 0 : index
    %c0_0 = arith.constant 0 : index
    %0 = vector.load %arg1[%c0, %c0_0] : memref<8x32xf32, #tpu.memory_space<vmem>>, vector<8x32xf32>
    %c0_1 = arith.constant 0 : index
    %c0_2 = arith.constant 0 : index
    %1 = vector.load %arg2[%c0_1, %c0_2] : memref<32x16xf32, #tpu.memory_space<vmem>>, vector<32x16xf32>
    %cst = arith.constant dense<0.000000e+00> : vector<8x16xf32>
    %2 = tpu.matmul %0, %1, %cst {dimension_numbers = #tpu.dot_dimension_numbers<[1], [0], [0], [1], [0, 0, 1, 1], [], []>} : vector<8x32xf32>, vector<32x16xf32>, vector<8x16xf32> -> vector<8x16xf32>
    %c0_3 = arith.constant 0 : index
    %c0_4 = arith.constant 0 : index
    %3 = vector.load %arg4[%c0_3, %c0_4] : memref<1x16xf32, #tpu.memory_space<vmem>>, vector<1x16xf32>
    %4 = vector.broadcast %3 : vector<1x16xf32> to vector<8x16xf32>
    %5 = arith.addf %2, %4 : vector<8x16xf32>
    %cst_5 = arith.constant 0.000000e+00 : f32
    %6 = vector.broadcast %cst_5 : f32 to vector<8x16xf32>
    %7 = arith.maximumf %5, %6 : vector<8x16xf32>
    %c0_6 = arith.constant 0 : index
    %c0_7 = arith.constant 0 : index
    %8 = vector.load %arg3[%c0_6, %c0_7] : memref<16x64xf32, #tpu.memory_space<vmem>>, vector<16x64xf32>
    %cst_8 = arith.constant dense<0.000000e+00> : vector<8x64xf32>
    %9 = tpu.matmul %7, %8, %cst_8 {dimension_numbers = #tpu.dot_dimension_numbers<[1], [0], [0], [1], [0, 0, 1, 1], [], []>} : vector<8x16xf32>, vector<16x64xf32>, vector<8x64xf32> -> vector<8x64xf32>
    %c0_9 = arith.constant 0 : index
    %c0_10 = arith.constant 0 : index
    %10 = vector.load %arg5[%c0_9, %c0_10] : memref<1x64xf32, #tpu.memory_space<vmem>>, vector<1x64xf32>
    %11 = vector.broadcast %10 : vector<1x64xf32> to vector<8x64xf32>
    %12 = arith.addf %9, %11 : vector<8x64xf32>
    %13 = vector.extract_strided_slice %12 {offsets = [0, 0], sizes = [8, 16], strides = [1, 1]} : vector<8x64xf32> to vector<8x16xf32>
    %14 = vector.extract_strided_slice %12 {offsets = [0, 16], sizes = [8, 16], strides = [1, 1]} : vector<8x64xf32> to vector<8x16xf32>
    %15 = vector.extract_strided_slice %12 {offsets = [0, 32], sizes = [8, 16], strides = [1, 1]} : vector<8x64xf32> to vector<8x16xf32>
    %16 = vector.extract_strided_slice %12 {offsets = [0, 48], sizes = [8, 16], strides = [1, 1]} : vector<8x64xf32> to vector<8x16xf32>
    %c0_11 = arith.constant 0 : index
    %c0_12 = arith.constant 0 : index
    %17 = vector.load %arg6[%c0_11, %c0_12] : memref<8x16xf32, #tpu.memory_space<vmem>>, vector<8x16xf32>
    %cst_13 = arith.constant 5.000000e-01 : f32
    %18 = vector.broadcast %cst_13 : f32 to vector<8x16xf32>
    %19 = arith.mulf %18, %15 : vector<8x16xf32>
    %20 = math.exp %19 : vector<8x16xf32>
    %21 = arith.mulf %17, %20 : vector<8x16xf32>
    %22 = arith.addf %21, %13 : vector<8x16xf32>
    %c0_14 = arith.constant 0 : index
    %c0_15 = arith.constant 0 : index
    %23 = vector.load %arg8[%c0_14, %c0_15] : memref<8x16xf32, #tpu.memory_space<vmem>>, vector<8x16xf32>
    tpu.vector_store %arg8[%c0_14, %c0_15], %22 {strides = array<i32>} : memref<8x16xf32, #tpu.memory_space<vmem>>, vector<8x16xf32>,
    %c0_16 = arith.constant 0 : index
    %c0_17 = arith.constant 0 : index
    %24 = vector.load %arg7[%c0_16, %c0_17] : memref<8x16xf32, #tpu.memory_space<vmem>>, vector<8x16xf32>
    %cst_18 = arith.constant 5.000000e-01 : f32
    %25 = vector.broadcast %cst_18 : f32 to vector<8x16xf32>
    %26 = arith.mulf %25, %16 : vector<8x16xf32>
    %27 = math.exp %26 : vector<8x16xf32>
    %28 = arith.mulf %24, %27 : vector<8x16xf32>
    %29 = arith.addf %28, %14 : vector<8x16xf32>
    %c0_19 = arith.constant 0 : index
    %c0_20 = arith.constant 0 : index
    %30 = vector.load %arg9[%c0_19, %c0_20] : memref<8x16xf32, #tpu.memory_space<vmem>>, vector<8x16xf32>
    tpu.vector_store %arg9[%c0_19, %c0_20], %29 {strides = array<i32>} : memref<8x16xf32, #tpu.memory_space<vmem>>, vector<8x16xf32>,
    return
  }
  func.func @transform_0(%arg0: i32) -> (i32, i32) {
    %c0_i32 = arith.constant 0 : i32
    %c0_i32_0 = arith.constant 0 : i32
    return %arg0, %c0_i32 : i32, i32
  }
  func.func @transform_1(%arg0: i32) -> (i32, i32) {
    %c0_i32 = arith.constant 0 : i32
    %c0_i32_0 = arith.constant 0 : i32
    %c0_i32_1 = arith.constant 0 : i32
    return %c0_i32, %c0_i32_0 : i32, i32
  }
  func.func @transform_2(%arg0: i32) -> (i32, i32) {
    %c0_i32 = arith.constant 0 : i32
    %c0_i32_0 = arith.constant 0 : i32
    %c0_i32_1 = arith.constant 0 : i32
    return %c0_i32, %c0_i32_0 : i32, i32
  }
  func.func @transform_3(%arg0: i32) -> (i32, i32) {
    %c0_i32 = arith.constant 0 : i32
    %c0_i32_0 = arith.constant 0 : i32
    %c0_i32_1 = arith.constant 0 : i32
    return %c0_i32, %c0_i32_0 : i32, i32
  }
  func.func @transform_4(%arg0: i32) -> (i32, i32) {
    %c0_i32 = arith.constant 0 : i32
    %c0_i32_0 = arith.constant 0 : i32
    %c0_i32_1 = arith.constant 0 : i32
    return %c0_i32, %c0_i32_0 : i32, i32
  }
  func.func @transform_5(%arg0: i32) -> (i32, i32) {
    %c0_i32 = arith.constant 0 : i32
    %c0_i32_0 = arith.constant 0 : i32
    return %arg0, %c0_i32 : i32, i32
  }
  func.func @transform_6(%arg0: i32) -> (i32, i32) {
    %c0_i32 = arith.constant 0 : i32
    %c0_i32_0 = arith.constant 0 : i32
    return %arg0, %c0_i32 : i32, i32
  }
  func.func @transform_7(%arg0: i32) -> (i32, i32) {
    %c0_i32 = arith.constant 0 : i32
    %c0_i32_0 = arith.constant 0 : i32
    return %arg0, %c0_i32 : i32, i32
  }
  func.func @transform_8(%arg0: i32) -> (i32, i32) {
    %c0_i32 = arith.constant 0 : i32
    %c0_i32_0 = arith.constant 0 : i32
    return %arg0, %c0_i32 : i32, i32
  }
}

</mosaic_0001>

<llo_original>
// kernel: tpu_custom_call.1
$region0: #{tpu_custom_call.1}
  #allocation0 [shape = 'u32[]', space=smem, size = 0x4, offset = 0x4, fixed_abs, tag = 'smem constant byte address 0x4 - core index']
  #allocation1 [shape = 'u32[72,128]{1,0:T(1,128)}', space=vmem, size = 0x9000, scoped, tag = 'internal scratch']
  %s0 = inlined_call_operand.vmem [shape: f32[8,32], index: 0, kind: input, shape index: {}]
  %s1 = inlined_call_operand.vmem [shape: f32[32,16], index: 1, kind: input, shape index: {}]
  %s2 = inlined_call_operand.vmem [shape: f32[16,64], index: 2, kind: input, shape index: {}]
  %s3 = inlined_call_operand.vmem [shape: f32[1,16], index: 3, kind: input, shape index: {}]
  %s4 = inlined_call_operand.vmem [shape: f32[1,64], index: 4, kind: input, shape index: {}]
  %s5 = inlined_call_operand.vmem [shape: f32[8,16], index: 5, kind: input, shape index: {}]
  %s6 = inlined_call_operand.vmem [shape: f32[8,16], index: 6, kind: input, shape index: {}]
  %s7 = inlined_call_operand.hbm [shape: f32[8,16], index: 7, kind: output, shape index: {0}]
  %s8 = inlined_call_operand.hbm [shape: f32[8,16], index: 8, kind: output, shape index: {1}]
  %9 = xla_tuple %s7, %s8
  %s10 = sld [smem:[#allocation0]]
  $region46: #{tpu_custom_call.1} parent=0
    _
  %s12 = ssub.s32 1, %s10
  %s13 = scalar_select 0, %s12, %s10
  $region1: #{tpu_custom_call.1} parent=0
    #allocation2 [shape = 'u8[4096]{0}', space=vmem, size = 0x1000, scoped, tag = 'output window, operand 0, single buffered']
    #allocation3 [shape = 's32[1]{0}', space=sflag, size = 0x4, scoped, tag = 'scoped memory for tpu_custom_call.1']
    #allocation4 [shape = 'u8[4096]{0}', space=vmem, size = 0x1000, scoped, tag = 'output window, operand 1, single buffered']
    #allocation5 [shape = 's32[1]{0}', space=sflag, size = 0x4, scoped, tag = 'scoped memory for tpu_custom_call.1']
    %14 = vsyncpa [#allocation3], 0
    %15 = vsyncpa [#allocation5], 0
    // Predicated region
    $region2: #{tpu_custom_call.1} parent=1 // pred_check
      _
    $region3: #{tpu_custom_call.1} parent=1 // pred_check_branch
      %17 = sbr.rel (0) target = $region5
    $region4: #{tpu_custom_call.1} parent=1 // pred_region
      _
    $region5: #{tpu_custom_call.1} parent=1 // pred_fallthru
      _
    // Predicated region
    $region6: #{tpu_custom_call.1} parent=1 // pred_check
      _
    $region7: #{tpu_custom_call.1} parent=1 // pred_check_branch
      %19 = sbr.rel (0) target = $region9
    $region8: #{tpu_custom_call.1} parent=1 // pred_region
      _
    $region9: #{tpu_custom_call.1} parent=1 // pred_fallthru
      _
    // Predicated region
    $region10: #{tpu_custom_call.1} parent=1 // pred_check
      _
    $region11: #{tpu_custom_call.1} parent=1 // pred_check_branch
      %21 = sbr.rel (0) target = $region13
    $region12: #{tpu_custom_call.1} parent=1 // pred_region
      _
    $region13: #{tpu_custom_call.1} parent=1 // pred_fallthru
      _
    // Predicated region
    $region14: #{tpu_custom_call.1} parent=1 // pred_check
      _
    $region15: #{tpu_custom_call.1} parent=1 // pred_check_branch
      %23 = sbr.rel (0) target = $region17
    $region16: #{tpu_custom_call.1} parent=1 // pred_region
      _
    $region17: #{tpu_custom_call.1} parent=1 // pred_fallthru
      _
    // Predicated region
    $region18: #{tpu_custom_call.1} parent=1 // pred_check
      _
    $region19: #{tpu_custom_call.1} parent=1 // pred_check_branch
      %25 = sbr.rel (0) target = $region21
    $region20: #{tpu_custom_call.1} parent=1 // pred_region
      _
    $region21: #{tpu_custom_call.1} parent=1 // pred_fallthru
      _
    // Predicated region
    $region22: #{tpu_custom_call.1} parent=1 // pred_check
      _
    $region23: #{tpu_custom_call.1} parent=1 // pred_check_branch
      %27 = sbr.rel (0) target = $region25
    $region24: #{tpu_custom_call.1} parent=1 // pred_region
      _
    $region25: #{tpu_custom_call.1} parent=1 // pred_fallthru
      _
    // Predicated region
    $region26: #{tpu_custom_call.1} parent=1 // pred_check
      _
    $region27: #{tpu_custom_call.1} parent=1 // pred_check_branch
      %29 = sbr.rel (0) target = $region29
    $region28: #{tpu_custom_call.1} parent=1 // pred_region
      _
    $region29: #{tpu_custom_call.1} parent=1 // pred_fallthru
      _
    %v30 = vld [vmem:[%s0] sm:$0xff]
    %v31 = vld [vmem:[%s1] sm:$0xff]
    %v32 = vld [vmem:[%s1 + $0x8] sm:$0xff]
    %v33 = vld [vmem:[%s1 + $0x10] sm:$0xff]
    %v34 = vld [vmem:[%s1 + $0x18] sm:$0xff]
    %v35 = vld [vmem:[%s3] sm:$0x1]
    %v37 = vperm.slane %v35, 0
    %vm39 = vcmask 261120
    %v41 = vsel %vm39, %v30, 0
    %43 = vmatpush.msra.mxu0 0.0
    %44 = vmatpush.msra.mxu0 0.0
    %45 = vmatpush.msra.mxu0 0.0
    %46 = vmatpush.msra.mxu0 0.0
    %47 = vmatpush.msra.mxu0 0.0
    %48 = vmatpush.msra.mxu0 0.0
    %49 = vmatpush.msra.mxu0 0.0
    %50 = vmatpush.msra.mxu0 0.0
    %51 = vmatpush.msra.mxu0 0.0
    %52 = vmatpush.msra.mxu0 0.0
    %53 = vmatpush.msra.mxu0 0.0
    %54 = vmatpush.msra.mxu0 0.0
    %55 = vmatpush.msra.mxu0 %v34
    %56 = vmatpush.msra.mxu0 %v33
    %57 = vmatpush.msra.mxu0 %v32
    %58 = vmatpush.msra.mxu0 %v31
    %59 = vmatmul.f32.gmra.mxu0 %v41
    %v60 = vpop.f32.mrf.mxu0
    %v61 = vadd.f32 %v37, %v60
    %62 = vdwg.mxu0
    %v63 = vmax.f32 %v61, 0.0
    %v64 = vld [vmem:[%s2] sm:$0xff]
    %v65 = vld [vmem:[%s2 + $0x8] sm:$0xff]
    %v66 = vld [vmem:[%s4] sm:$0x1]
    %v68 = vperm.slane %v66, 0
    %vm70 = vcmask 130048
    %v72 = vsel %vm70, %v63, 0
    %74 = vmatpush.msra.mxu0 0.0
    %75 = vmatpush.msra.mxu0 0.0
    %76 = vmatpush.msra.mxu0 0.0
    %77 = vmatpush.msra.mxu0 0.0
    %78 = vmatpush.msra.mxu0 0.0
    %79 = vmatpush.msra.mxu0 0.0
    %80 = vmatpush.msra.mxu0 0.0
    %81 = vmatpush.msra.mxu0 0.0
    %82 = vmatpush.msra.mxu0 0.0
    %83 = vmatpush.msra.mxu0 0.0
    %84 = vmatpush.msra.mxu0 0.0
    %85 = vmatpush.msra.mxu0 0.0
    %86 = vmatpush.msra.mxu0 0.0
    %87 = vmatpush.msra.mxu0 0.0
    %88 = vmatpush.msra.mxu0 %v65
    %89 = vmatpush.msra.mxu0 %v64
    %90 = vmatmul.f32.gmra.mxu0 %v72
    %v91 = vpop.f32.mrf.mxu0
    %v92 = vadd.f32 %v68, %v91
    %93 = vdwg.mxu0
    %v94 = vld [vmem:[%s5] sm:$0xff]
    %v95 = vmul.f32 %v92, 0.5
    %v96 = vmul.f32 %v95, 1.442695
    %v97 = vpow.pop %v96
    %99 = vrot.lane.b32.xlu0 %v97, 96
    %v100 = vpop.permute.xlu0 %99
    %v102 = vmul.f32 %v94, %v100
    %v103 = vadd.f32 %v102, %v92
    %104 = vst.msk [vmem:[#allocation2] sm:$0xff] %vm70, %v103
    %v105 = vld [vmem:[%s6] sm:$0xff]
    %106 = vrot.lane.b32.xlu0 %v97, 80
    %v107 = vpop.permute.xlu0 %106
    %v109 = vmul.f32 %v105, %v107
    %111 = vrot.lane.b32.xlu0 %v92, 112
    %v112 = vpop.permute.xlu0 %111
    %v114 = vadd.f32 %v109, %v112
    %115 = vst.msk [vmem:[#allocation4] sm:$0xff] %vm70, %v114
    // Predicated region
    $region30: #{tpu_custom_call.1} parent=1 // pred_check
      _
    $region31: #{tpu_custom_call.1} parent=1 // pred_check_branch
      %117 = sbr.rel (0) target = $region33
    $region32: #{tpu_custom_call.1} parent=1 // pred_region
      %119 = vsyncadd [#allocation3], 0
      %s121 = sshll.u32 [#allocation2], 4
      %s122 = int_to_ptr.vmem [resolvable:$true] %s121
      %s123 = sshll.u32 %s7, 4
      %s124 = int_to_ptr.hbm [resolvable:$true] %s123
      %126 = dma.vmem_to_hbm [thread:$0]  %s122, 128, %s124, [#allocation3]
    $region33: #{tpu_custom_call.1} parent=1 // pred_fallthru
      _
    // Predicated region
    $region34: #{tpu_custom_call.1} parent=1 // pred_check
      _
    $region35: #{tpu_custom_call.1} parent=1 // pred_check_branch
      %128 = sbr.rel (0) target = $region37
    $region36: #{tpu_custom_call.1} parent=1 // pred_region
      %130 = vsyncadd [#allocation5], 0
      %s132 = sshll.u32 [#allocation4], 4
      %s133 = int_to_ptr.vmem [resolvable:$true] %s132
      %s134 = sshll.u32 %s8, 4
      %s135 = int_to_ptr.hbm [resolvable:$true] %s134
      %137 = dma.vmem_to_hbm [thread:$0]  %s133, 128, %s135, [#allocation5]
    $region37: #{tpu_custom_call.1} parent=1 // pred_fallthru
      _
    // Predicated region
    $region38: #{tpu_custom_call.1} parent=1 // pred_check
      _
    $region39: #{tpu_custom_call.1} parent=1 // pred_check_branch
      %139 = sbr.rel (0) target = $region41
    $region40: #{tpu_custom_call.1} parent=1 // pred_region
      %141 = dma.done [#allocation3], 128
    $region41: #{tpu_custom_call.1} parent=1 // pred_fallthru
      _
    // Predicated region
    $region42: #{tpu_custom_call.1} parent=1 // pred_check
      _
    $region43: #{tpu_custom_call.1} parent=1 // pred_check_branch
      %143 = sbr.rel (0) target = $region45
    $region44: #{tpu_custom_call.1} parent=1 // pred_region
      %145 = dma.done [#allocation5], 128
    $region45: #{tpu_custom_call.1} parent=1 // pred_fallthru
      _
    %146 = vsyncpa [#allocation3], 1
    %147 = vsyncpa [#allocation5], 1

</llo_original>
